<compile_context>
chip_gen: v7x
topology: tpu7x:2x2x1
jax: 0.10.0
libtpu: 0.0.40
codegen_flags: <defaults>
</compile_context>

<pallas_src>
import functools

import jax
import jax.numpy as jnp
from jax.experimental import pallas as pl
from jax.experimental.pallas import tpu as pltpu


def _mean_pool_kernel(x_ref, o_ref, acc_ref, *, inv_s):
    """One grid step: accumulate the (TB, TS, E) block's sum over the seq axis."""
    s = pl.program_id(1)

    @pl.when(s == 0)
    def _init():
        acc_ref[...] = jnp.zeros_like(acc_ref)

    # Partial sum over the sequence axis of this block, accumulated in f32.
    acc_ref[...] += jnp.sum(x_ref[...].astype(jnp.float32), axis=1)

    @pl.when(s == pl.num_programs(1) - 1)
    def _finalize():
        o_ref[...] = (acc_ref[...] * inv_s).astype(o_ref.dtype)


def _divisor_tile(dim, target, align):
    """Largest t <= target with dim % t == 0 and t % align == 0; else the full dim.

    Guarantees the (8, 128) BlockSpec constraint: the tile is either a multiple of
    `align` or equal to the full array extent.
    """
    target = max(1, min(dim, int(target)))
    if target >= dim:
        return dim
    for t in range(target, 0, -1):
        if dim % t == 0 and t % align == 0:
            return t
    return dim


def _pick_tiles(B, S, E, itemsize, vmem_block_bytes=4 * 1024 * 1024):
    """Pick (TB, TS) so the input block is as large as possible within a VMEM budget."""
    budget_elems = max(vmem_block_bytes // max(itemsize, 1), 8 * 128)
    max_rows = max(budget_elems // max(E, 1), 8)
    ts = _divisor_tile(S, max_rows, 8)                     # prefer whole sequences
    tb = _divisor_tile(B, max(max_rows // ts, 1), 8)       # then grow the batch tile
    return tb, ts


def global_mean_pooling_pallas(x, *, tb=None, ts=None):
    """Mean over axis 1: x (B, S, E) -> (B, E). Matches torch.mean(x, dim=1)."""
    B, S, E = x.shape
    auto_tb, auto_ts = _pick_tiles(B, S, E, x.dtype.itemsize)
    tb = auto_tb if tb is None else tb
    ts = auto_ts if ts is None else ts
    assert B % tb == 0 and S % ts == 0, "tile sizes must divide the array dims"

    grid = (B // tb, S // ts)
    kernel = functools.partial(_mean_pool_kernel, inv_s=1.0 / S)

    itemsize = x.dtype.itemsize
    cost = pl.CostEstimate(
        flops=B * S * E + B * E,            # one add per input element + final scale
        transcendentals=0,
        bytes_accessed=B * S * E * itemsize + B * E * itemsize,
    )

    return pl.pallas_call(
        kernel,
        out_shape=jax.ShapeDtypeStruct((B, E), x.dtype),
        grid_spec=pltpu.PrefetchScalarGridSpec(
            num_scalar_prefetch=0,
            grid=grid,
            in_specs=[pl.BlockSpec((tb, ts, E), lambda b, s: (b, s, 0))],
            out_specs=pl.BlockSpec((tb, E), lambda b, s: (b, 0)),
            scratch_shapes=[pltpu.VMEM((tb, E), jnp.float32)],
        ),
        compiler_params=pltpu.CompilerParams(
            dimension_semantics=("parallel", "arbitrary"),
        ),
        cost_estimate=cost,
    )(x)


if __name__ == "__main__":
    key = jax.random.PRNGKey(0)
    k1, k2 = jax.random.split(key)

    # Small example consistent with the module: (batch=2, seq=8, hidden=32).
    B, S, E = 2, 8, 32
    x = jax.random.normal(k1, (B, S, E), jnp.float32)

    out = jax.block_until_ready(global_mean_pooling_pallas(x))
    ref = jnp.mean(x, axis=1)
    assert out.shape == (B, E)
    assert jnp.allclose(out, ref, atol=1e-5, rtol=1e-5), (
        f"max abs diff {jnp.max(jnp.abs(out - ref))}"
    )

    # Larger check that exercises the multi-step sequence-axis accumulation
    # (forced ts < S so the resident f32 accumulator path runs over the grid).
    B2, S2, E2 = 8, 256, 128
    x2 = jax.random.normal(k2, (B2, S2, E2), jnp.float32)
    out2 = jax.block_until_ready(global_mean_pooling_pallas(x2, tb=8, ts=64))
    ref2 = jnp.mean(x2, axis=1)
    assert jnp.allclose(out2, ref2, atol=1e-5, rtol=1e-5), (
        f"max abs diff {jnp.max(jnp.abs(out2 - ref2))}"
    )

    print("KERNEL_OK")
</pallas_src>

<mosaic_0001>
module attributes {stable_mosaic.version = 11 : i64} {
  func.func @_mean_pool_kernel(%arg0: i32, %arg1: i32, %arg2: memref<2x8x32xf32, #tpu.memory_space<vmem>>, %arg3: memref<2x32xf32, #tpu.memory_space<vmem>>, %arg4: memref<2x32xf32, #tpu.memory_space<vmem>>) attributes {dimension_semantics = [#tpu.dimension_semantics<parallel>, #tpu.dimension_semantics<arbitrary>], iteration_bounds = array<i64: 1, 1>, scalar_prefetch = 0 : i64, scratch_operands = 1 : i64, tpu.core_type = #tpu.core_type<tc>, window_params = [{transform_indices = @transform_0, window_bounds = array<i64: 2, 8, 32>}, {transform_indices = @transform_1, window_bounds = array<i64: 2, 32>}]} {
    %c0_i32 = arith.constant 0 : i32
    %0 = arith.cmpi eq, %arg1, %c0_i32 : i32
    %1 = arith.extui %0 : i1 to i32
    %c0_i32_0 = arith.constant 0 : i32
    %2 = arith.cmpi ne, %1, %c0_i32_0 : i32
    scf.if %2 {
      %cst_9 = arith.constant 0.000000e+00 : f32
      %11 = vector.broadcast %cst_9 : f32 to vector<2x32xf32>
      %c0_10 = arith.constant 0 : index
      %c0_11 = arith.constant 0 : index
      %12 = vector.load %arg4[%c0_10, %c0_11] : memref<2x32xf32, #tpu.memory_space<vmem>>, vector<2x32xf32>
      tpu.vector_store %arg4[%c0_10, %c0_11], %11 {strides = array<i32>} : memref<2x32xf32, #tpu.memory_space<vmem>>, vector<2x32xf32>,
    } else {
    }
    %c0 = arith.constant 0 : index
    %c0_1 = arith.constant 0 : index
    %3 = vector.load %arg4[%c0, %c0_1] : memref<2x32xf32, #tpu.memory_space<vmem>>, vector<2x32xf32>
    %c0_2 = arith.constant 0 : index
    %c0_3 = arith.constant 0 : index
    %c0_4 = arith.constant 0 : index
    %4 = vector.load %arg2[%c0_2, %c0_3, %c0_4] : memref<2x8x32xf32, #tpu.memory_space<vmem>>, vector<2x8x32xf32>
    %cst = arith.constant dense<0.000000e+00> : vector<2x32xf32>
    %5 = vector.multi_reduction <add>, %4, %cst [1] : vector<2x8x32xf32> to vector<2x32xf32>
    %6 = arith.addf %3, %5 : vector<2x32xf32>
    %c0_5 = arith.constant 0 : index
    %c0_6 = arith.constant 0 : index
    %7 = vector.load %arg4[%c0_5, %c0_6] : memref<2x32xf32, #tpu.memory_space<vmem>>, vector<2x32xf32>
    tpu.vector_store %arg4[%c0_5, %c0_6], %6 {strides = array<i32>} : memref<2x32xf32, #tpu.memory_space<vmem>>, vector<2x32xf32>,
    %c0_i32_7 = arith.constant 0 : i32
    %8 = arith.cmpi eq, %arg1, %c0_i32_7 : i32
    %9 = arith.extui %8 : i1 to i32
    %c0_i32_8 = arith.constant 0 : i32
    %10 = arith.cmpi ne, %9, %c0_i32_8 : i32
    scf.if %10 {
      %c0_9 = arith.constant 0 : index
      %c0_10 = arith.constant 0 : index
      %11 = vector.load %arg4[%c0_9, %c0_10] : memref<2x32xf32, #tpu.memory_space<vmem>>, vector<2x32xf32>
      %cst_11 = arith.constant 1.250000e-01 : f32
      %12 = vector.broadcast %cst_11 : f32 to vector<2x32xf32>
      %13 = arith.mulf %11, %12 : vector<2x32xf32>
      %c0_12 = arith.constant 0 : index
      %c0_13 = arith.constant 0 : index
      %14 = vector.load %arg3[%c0_12, %c0_13] : memref<2x32xf32, #tpu.memory_space<vmem>>, vector<2x32xf32>
      tpu.vector_store %arg3[%c0_12, %c0_13], %13 {strides = array<i32>} : memref<2x32xf32, #tpu.memory_space<vmem>>, vector<2x32xf32>,
    } else {
    }
    return
  }
  func.func @transform_0(%arg0: i32, %arg1: i32) -> (i32, i32, i32) {
    %c0_i32 = arith.constant 0 : i32
    %c0_i32_0 = arith.constant 0 : i32
    return %arg0, %arg1, %c0_i32 : i32, i32, i32
  }
  func.func @transform_1(%arg0: i32, %arg1: i32) -> (i32, i32) {
    %c0_i32 = arith.constant 0 : i32
    %c0_i32_0 = arith.constant 0 : i32
    return %arg0, %c0_i32 : i32, i32
  }
}

</mosaic_0001>

<llo_original>
// kernel: tpu_custom_call.1
$region0: #{tpu_custom_call.1}
  #allocation0 [shape = 'u32[]', space=smem, size = 0x4, offset = 0x4, fixed_abs, tag = 'smem constant byte address 0x4 - core index']
  #allocation1 [shape = 'u32[144,128]{1,0:T(1,128)}', space=vmem, size = 0x12000, scoped, tag = 'internal scratch']
  #allocation2 [shape = 'f32[2,32]{1,0:T(2,128)}', space=vmem, size = 0x400, scoped, tag = 'scratch operand']
  %s0 = inlined_call_operand.hbm [shape: f32[2,8,32], index: 0, kind: input, shape index: {}]
  %s1 = inlined_call_operand.hbm [shape: f32[2,32], index: 1, kind: output, shape index: {}]
  %s2 = sld [smem:[#allocation0]]
  $region26: #{tpu_custom_call.1} parent=0
    _
  %s4 = ssub.s32 1, %s2
  %s5 = scalar_select 0, %s4, %s2
  $region1: #{tpu_custom_call.1} parent=0
    #allocation3 [shape = 'u8[8192]{0}', space=vmem, size = 0x2000, scoped, tag = 'input window, operand 0, single buffered']
    #allocation4 [shape = 's32[1]{0}', space=sflag, size = 0x4, scoped, tag = 'scoped memory for tpu_custom_call.1']
    #allocation5 [shape = 's32[1]{0}', space=sflag, size = 0x4, scoped, tag = 'scoped memory for tpu_custom_call.1']
    #allocation6 [shape = 'u8[1024]{0}', space=vmem, size = 0x400, scoped, tag = 'output window, operand 0, single buffered']
    %6 = vsyncpa [#allocation4], 0
    %7 = vsyncpa [#allocation5], 0
    // Predicated region
    $region2: #{tpu_custom_call.1} parent=1 // pred_check
      _
    $region3: #{tpu_custom_call.1} parent=1 // pred_check_branch
      %9 = sbr.rel (0) target = $region5
    $region4: #{tpu_custom_call.1} parent=1 // pred_region
      %s11 = ssub.s32 256, 256
      %12 = vsyncadd [#allocation4], %s11
      %s13 = sshll.u32 [#allocation3], 4
      %s14 = int_to_ptr.vmem [resolvable:$true] %s13
      %19 = dma.hbm_to_vmem [thread:$0]  %s0, 256, %s14, [#allocation4], 128, 128, 8
    $region5: #{tpu_custom_call.1} parent=1 // pred_fallthru
      _
    // Predicated region
    $region6: #{tpu_custom_call.1} parent=1 // pred_check
      _
    $region7: #{tpu_custom_call.1} parent=1 // pred_check_branch
      %21 = sbr.rel (0) target = $region9
    $region8: #{tpu_custom_call.1} parent=1 // pred_region
      %22 = dma.done [#allocation4], 256
    $region9: #{tpu_custom_call.1} parent=1 // pred_fallthru
      _
    %p23 = scmp.eq.s32.totalorder 0, 0
    // Predicated region
    $region10: #{tpu_custom_call.1} parent=1 // pred_check
      %p24 = pneg %p23
    $region11: #{tpu_custom_call.1} parent=1 // pred_check_branch
      %26 = sbr.rel (%p24) target = $region13
    $region12: #{tpu_custom_call.1} parent=1 // pred_region
      %vm27 = vcmask 254976
      %28 = vst.msk [vmem:[#allocation2] sm:$0x3] %vm27, 0.0
    $region13: #{tpu_custom_call.1} parent=1 // pred_fallthru
      _
    %v29 = vld [vmem:[#allocation2] sm:$0x3]
    %v30 = vld [vmem:[#allocation3] sm:$0xff]
    %v31 = vld [vmem:[#allocation3 + $0x8] sm:$0xff]
    %vm32 = vcmask 261120
    %v33 = vsel %vm32, %v30, 0.0
    %v34 = vrot.slane %v33, 4
    %v35 = vadd.f32 %v33, %v34
    %v36 = vrot.slane %v35, 2
    %v37 = vadd.f32 %v35, %v36
    %v38 = vrot.slane %v37, 1
    %v39 = vadd.f32 %v37, %v38
    %v40 = vsel %vm32, %v31, 0.0
    %v41 = vrot.slane %v40, 4
    %v42 = vadd.f32 %v40, %v41
    %v43 = vrot.slane %v42, 2
    %v44 = vadd.f32 %v42, %v43
    %v45 = vrot.slane %v44, 1
    %v46 = vadd.f32 %v44, %v45
    %vm49 = vcmask 1041409
    %v50 = vsel %vm49, %v46, %v39
    %v52 = vadd.f32 %v29, %v50
    %vm53 = vcmask 254976
    %54 = vst.msk [vmem:[#allocation2] sm:$0x3] %vm53, %v52
    // Predicated region
    $region14: #{tpu_custom_call.1} parent=1 // pred_check
      %p55 = pneg %p23
    $region15: #{tpu_custom_call.1} parent=1 // pred_check_branch
      %57 = sbr.rel (%p55) target = $region17
    $region16: #{tpu_custom_call.1} parent=1 // pred_region
      %v58 = vld [vmem:[#allocation2] sm:$0x3]
      %v59 = vmul.f32 %v58, 0.125
      %60 = vst.msk [vmem:[#allocation6] sm:$0x3] %vm53, %v59
    $region17: #{tpu_custom_call.1} parent=1 // pred_fallthru
      _
    // Predicated region
    $region18: #{tpu_custom_call.1} parent=1 // pred_check
      _
    $region19: #{tpu_custom_call.1} parent=1 // pred_check_branch
      %62 = sbr.rel (0) target = $region21
    $region20: #{tpu_custom_call.1} parent=1 // pred_region
      %s64 = ssub.s32 32, 32
      %65 = vsyncadd [#allocation5], %s64
      %s67 = sshll.u32 [#allocation6], 4
      %s68 = int_to_ptr.vmem [resolvable:$true] %s67
      %70 = dma.vmem_to_hbm [thread:$0]  %s68, 32, %s1, [#allocation5]
    $region21: #{tpu_custom_call.1} parent=1 // pred_fallthru
      _
    // Predicated region
    $region22: #{tpu_custom_call.1} parent=1 // pred_check
      _
    $region23: #{tpu_custom_call.1} parent=1 // pred_check_branch
      %72 = sbr.rel (0) target = $region25
    $region24: #{tpu_custom_call.1} parent=1 // pred_region
      %73 = dma.done [#allocation5], 32
    $region25: #{tpu_custom_call.1} parent=1 // pred_fallthru
      _
    %74 = vsyncpa [#allocation4], 1
    %75 = vsyncpa [#allocation5], 1

</llo_original>
